<compile_context>
chip_gen: v6e
topology: v6e:2x2x1
jax: 0.10.0
libtpu: 0.0.40
codegen_flags: <defaults>
</compile_context>

<pallas_src>
import functools

import jax
import jax.numpy as jnp
from jax.experimental import pallas as pl
from jax.experimental.pallas import tpu as pltpu

PAD = 128          # lane-dense width every layer is padded to
NUM_LAYERS = 5


def _round_up(n, m):
    return ((n + m - 1) // m) * m


def _cdiv(a, b):
    return (a + b - 1) // b


def bf16_elementwise_supported():
    """bf16 VPU/EUP exists on v6e/v7x; v5e and older keep f32 elementwise."""
    try:
        kind = jax.devices()[0].device_kind.lower()
    except Exception:
        return False
    return ("v6" in kind) or ("v7" in kind) or ("tpu7" in kind)


def _mlp_kernel(x_ref, w_ref, b_ref, o_ref, *, bf16_elementwise):
    """Fused 5x (Linear + Tanh), all layers padded to 128 lanes.

    x_ref : (TILE_B, 128)  f32   activation tile (batch grid axis)
    w_ref : (5, 128, 128)  bf16  weight slab, VMEM-resident across grid steps
    b_ref : (5, 1, 128)    f32   bias slab,   VMEM-resident across grid steps
    o_ref : (TILE_B, 128)  f32   output tile (lane-dense)
    """
    if bf16_elementwise:
        # v6e/v7x: bf16-resident activations, bf16 tanh (EUP) -> halves the
        # elementwise/transcendental vreg traffic; accumulation stays f32.
        h = x_ref[...].astype(jnp.bfloat16)
        for l in range(NUM_LAYERS):                 # static unrolled layer loop
            acc = jnp.dot(h, w_ref[l], preferred_element_type=jnp.float32)
            h = jnp.tanh((acc + b_ref[l]).astype(jnp.bfloat16))
    else:
        # v5e and older: f32 bias-add + tanh; cast to bf16 only at the MXU.
        h = x_ref[...]
        for l in range(NUM_LAYERS):
            acc = jnp.dot(h.astype(jnp.bfloat16), w_ref[l],
                          preferred_element_type=jnp.float32)
            h = jnp.tanh(acc + b_ref[l])
    o_ref[...] = h.astype(o_ref.dtype)


def pack_params(params):
    """One-time packing of the 5 (W, b) pairs into zero-padded lane-dense slabs.

    Call this ONCE at init; do not rebuild per forward call.
    """
    w_slab = jnp.zeros((NUM_LAYERS, PAD, PAD), jnp.float32)
    b_slab = jnp.zeros((NUM_LAYERS, 1, PAD), jnp.float32)
    for l, (w, b) in enumerate(params):
        fi, fo = w.shape
        w_slab = w_slab.at[l, :fi, :fo].set(w)
        b_slab = b_slab.at[l, 0, :fo].set(b.reshape(-1))
    w_slab = w_slab.astype(jnp.bfloat16)            # bf16 operands for the MXU
    out_dim = params[-1][0].shape[1]
    return w_slab, b_slab, out_dim


def _choose_tiling(batch, max_tile_b):
    """Tile the batch into an even (when > 1) number of near-equal tiles."""
    rows = _round_up(batch, 8)                      # sublane alignment
    n_tiles = _cdiv(rows, max_tile_b)
    if n_tiles > 1 and n_tiles % 2 == 1:            # balanced 2-TC split (v7x)
        n_tiles += 1
    tile_b = _round_up(_cdiv(rows, n_tiles), 8)     # minimal last-tile padding
    return tile_b, tile_b * n_tiles, n_tiles


@functools.partial(jax.jit,
                   static_argnames=("out_dim", "max_tile_b", "bf16_elementwise"))
def mlp_forward(x, w_slab, b_slab, *, out_dim,
                max_tile_b=512, bf16_elementwise=False):
    """x: (batch, in_dim) f32; slabs from pack_params()."""
    batch, in_dim = x.shape
    tile_b, padded_batch, n_tiles = _choose_tiling(batch, max_tile_b)

    # Pad batch rows + input lanes (zeros are benign: tanh(0) = 0).
    x_pad = jnp.zeros((padded_batch, PAD), x.dtype).at[:batch, :in_dim].set(x)

    cost = pl.CostEstimate(
        flops=2 * padded_batch * PAD * PAD * NUM_LAYERS,
        transcendentals=padded_batch * PAD * NUM_LAYERS,
        bytes_accessed=(padded_batch * PAD * 4 * 2          # x in + out (f32)
                        + NUM_LAYERS * PAD * PAD * 2        # bf16 weights
                        + NUM_LAYERS * PAD * 4),            # f32 biases
    )

    out = pl.pallas_call(
        functools.partial(_mlp_kernel, bf16_elementwise=bf16_elementwise),
        out_shape=jax.ShapeDtypeStruct((padded_batch, PAD), jnp.float32),
        grid=(n_tiles,),
        in_specs=[
            pl.BlockSpec((tile_b, PAD), lambda i: (i, 0)),
            # weights/biases: same block every step -> stay VMEM-resident
            pl.BlockSpec((NUM_LAYERS, PAD, PAD), lambda i: (0, 0, 0)),
            pl.BlockSpec((NUM_LAYERS, 1, PAD), lambda i: (0, 0, 0)),
        ],
        out_specs=pl.BlockSpec((tile_b, PAD), lambda i: (i, 0)),
        compiler_params=pltpu.CompilerParams(
            dimension_semantics=("parallel",)),     # 2-TC sharding on v7x
        cost_estimate=cost,
    )(x_pad, w_slab, b_slab)

    return out[:batch, :out_dim]


def init_params(key, dims):
    """Deterministic PyTorch-style init: U(-1/sqrt(fan_in), 1/sqrt(fan_in))."""
    params = []
    for i in range(len(dims) - 1):
        fan_in, fan_out = dims[i], dims[i + 1]
        key, kw, kb = jax.random.split(key, 3)
        bound = 1.0 / (fan_in ** 0.5)
        w = jax.random.uniform(kw, (fan_in, fan_out), jnp.float32,
                               minval=-bound, maxval=bound)
        b = jax.random.uniform(kb, (fan_out,), jnp.float32,
                               minval=-bound, maxval=bound)
        params.append((w, b))
    return params


def reference_forward(x, params, *, bf16_elementwise):
    """Pure-JAX reference mirroring the kernel's dtype choices."""
    if bf16_elementwise:
        h = x.astype(jnp.bfloat16)
        for w, b in params:
            acc = jnp.dot(h, w.astype(jnp.bfloat16),
                          preferred_element_type=jnp.float32)
            h = jnp.tanh((acc + b.reshape(1, -1)).astype(jnp.bfloat16))
        return h.astype(jnp.float32)
    h = x
    for w, b in params:
        acc = jnp.dot(h.astype(jnp.bfloat16), w.astype(jnp.bfloat16),
                      preferred_element_type=jnp.float32)
        h = jnp.tanh(acc + b.reshape(1, -1))
    return h


def reference_forward_f32(x, params):
    """Full-f32 reference (exact PyTorch-equivalent math)."""
    h = x
    for w, b in params:
        h = jnp.tanh(h @ w + b.reshape(1, -1))
    return h


if __name__ == "__main__":
    # Module dims: in_dim=32, hidden = 64, 64, 32, 32, out_dim=8
    dims = (32, 64, 64, 32, 32, 8)

    key = jax.random.PRNGKey(0)
    key, kparams = jax.random.split(key)
    params = init_params(kparams, dims)
    w_slab, b_slab, out_dim = pack_params(params)   # packed ONCE (hoisted)

    use_bf16 = bf16_elementwise_supported()
    tol = 7e-2 if use_bf16 else 2e-4                # kernel-mirrored tolerance
    tol_f32 = 1.5e-1 if use_bf16 else 5e-2          # vs exact-f32 tolerance

    # --- small batch: single tile, grid=(1,) ---------------------------------
    batch = 8
    key, kx = jax.random.split(key)
    x = jax.random.normal(kx, (batch, dims[0]), jnp.float32)
    out = jax.block_until_ready(
        mlp_forward(x, w_slab, b_slab, out_dim=out_dim,
                    bf16_elementwise=use_bf16))
    assert out.shape == (batch, dims[-1])
    ref = reference_forward(x, params, bf16_elementwise=use_bf16)
    assert jnp.allclose(out, ref, atol=tol, rtol=tol), "mismatch vs mirrored ref"
    ref_f32 = reference_forward_f32(x, params)
    assert jnp.allclose(out, ref_f32, atol=tol_f32, rtol=tol_f32), "mismatch vs f32 ref"

    # --- non-multiple batch: 2 balanced tiles of 304 rows (grid=(2,)) --------
    batch2 = 600
    key, kx2 = jax.random.split(key)
    x2 = jax.random.normal(kx2, (batch2, dims[0]), jnp.float32)
    out2 = jax.block_until_ready(
        mlp_forward(x2, w_slab, b_slab, out_dim=out_dim,
                    bf16_elementwise=use_bf16))
    assert out2.shape == (batch2, dims[-1])
    ref2 = reference_forward(x2, params, bf16_elementwise=use_bf16)
    assert jnp.allclose(out2, ref2, atol=tol, rtol=tol), "mismatch (2-tile grid)"

    # --- batch that would give an odd grid: rounded to 4 tiles of 280 rows ---
    batch3 = 1100
    key, kx3 = jax.random.split(key)
    x3 = jax.random.normal(kx3, (batch3, dims[0]), jnp.float32)
    out3 = jax.block_until_ready(
        mlp_forward(x3, w_slab, b_slab, out_dim=out_dim,
                    bf16_elementwise=use_bf16))
    assert out3.shape == (batch3, dims[-1])
    ref3 = reference_forward(x3, params, bf16_elementwise=use_bf16)
    assert jnp.allclose(out3, ref3, atol=tol, rtol=tol), "mismatch (even-grid path)"

    print("KERNEL_OK")
</pallas_src>

<mosaic_0001>
module attributes {stable_mosaic.version = 11 : i64} {
  func.func @_mlp_kernel(%arg0: i32, %arg1: memref<8x128xf32, #tpu.memory_space<vmem>>, %arg2: memref<5x128x128xbf16, #tpu.memory_space<vmem>>, %arg3: memref<5x1x128xf32, #tpu.memory_space<vmem>>, %arg4: memref<8x128xf32, #tpu.memory_space<vmem>>) attributes {dimension_semantics = [#tpu.dimension_semantics<parallel>], iteration_bounds = array<i64: 1>, scalar_prefetch = 0 : i64, scratch_operands = 0 : i64, tpu.core_type = #tpu.core_type<tc>, window_params = [{transform_indices = @transform_0, window_bounds = array<i64: 8, 128>}, {pipeline_mode = #tpu.pipeline_mode<synchronous>, transform_indices = @transform_1, window_bounds = array<i64: 5, 128, 128>}, {pipeline_mode = #tpu.pipeline_mode<synchronous>, transform_indices = @transform_2, window_bounds = array<i64: 5, 1, 128>}, {transform_indices = @transform_3, window_bounds = array<i64: 8, 128>}]} {
    %c0 = arith.constant 0 : index
    %c0_0 = arith.constant 0 : index
    %0 = vector.load %arg1[%c0, %c0_0] : memref<8x128xf32, #tpu.memory_space<vmem>>, vector<8x128xf32>
    %1 = arith.truncf %0 : vector<8x128xf32> to vector<8x128xbf16>
    %c0_1 = arith.constant 0 : index
    %c0_2 = arith.constant 0 : index
    %c0_3 = arith.constant 0 : index
    %2 = vector.load %arg2[%c0_1, %c0_2, %c0_3] : memref<5x128x128xbf16, #tpu.memory_space<vmem>>, vector<1x128x128xbf16>
    %3 = vector.shape_cast %2 : vector<1x128x128xbf16> to vector<128x128xbf16>
    %cst = arith.constant dense<0.000000e+00> : vector<8x128xf32>
    %4 = tpu.matmul %1, %3, %cst {dimension_numbers = #tpu.dot_dimension_numbers<[1], [0], [0], [1], [0, 0, 1, 1], [], []>} : vector<8x128xbf16>, vector<128x128xbf16>, vector<8x128xf32> -> vector<8x128xf32>
    %c0_4 = arith.constant 0 : index
    %c0_5 = arith.constant 0 : index
    %c0_6 = arith.constant 0 : index
    %5 = vector.load %arg3[%c0_4, %c0_5, %c0_6] : memref<5x1x128xf32, #tpu.memory_space<vmem>>, vector<1x1x128xf32>
    %6 = vector.shape_cast %5 : vector<1x1x128xf32> to vector<1x128xf32>
    %7 = vector.broadcast %6 : vector<1x128xf32> to vector<8x128xf32>
    %8 = arith.addf %4, %7 : vector<8x128xf32>
    %9 = math.tanh %8 : vector<8x128xf32>
    %10 = arith.truncf %9 : vector<8x128xf32> to vector<8x128xbf16>
    %c1 = arith.constant 1 : index
    %c0_7 = arith.constant 0 : index
    %c0_8 = arith.constant 0 : index
    %11 = vector.load %arg2[%c1, %c0_7, %c0_8] : memref<5x128x128xbf16, #tpu.memory_space<vmem>>, vector<1x128x128xbf16>
    %12 = vector.shape_cast %11 : vector<1x128x128xbf16> to vector<128x128xbf16>
    %cst_9 = arith.constant dense<0.000000e+00> : vector<8x128xf32>
    %13 = tpu.matmul %10, %12, %cst_9 {dimension_numbers = #tpu.dot_dimension_numbers<[1], [0], [0], [1], [0, 0, 1, 1], [], []>} : vector<8x128xbf16>, vector<128x128xbf16>, vector<8x128xf32> -> vector<8x128xf32>
    %c1_10 = arith.constant 1 : index
    %c0_11 = arith.constant 0 : index
    %c0_12 = arith.constant 0 : index
    %14 = vector.load %arg3[%c1_10, %c0_11, %c0_12] : memref<5x1x128xf32, #tpu.memory_space<vmem>>, vector<1x1x128xf32>
    %15 = vector.shape_cast %14 : vector<1x1x128xf32> to vector<1x128xf32>
    %16 = vector.broadcast %15 : vector<1x128xf32> to vector<8x128xf32>
    %17 = arith.addf %13, %16 : vector<8x128xf32>
    %18 = math.tanh %17 : vector<8x128xf32>
    %19 = arith.truncf %18 : vector<8x128xf32> to vector<8x128xbf16>
    %c2 = arith.constant 2 : index
    %c0_13 = arith.constant 0 : index
    %c0_14 = arith.constant 0 : index
    %20 = vector.load %arg2[%c2, %c0_13, %c0_14] : memref<5x128x128xbf16, #tpu.memory_space<vmem>>, vector<1x128x128xbf16>
    %21 = vector.shape_cast %20 : vector<1x128x128xbf16> to vector<128x128xbf16>
    %cst_15 = arith.constant dense<0.000000e+00> : vector<8x128xf32>
    %22 = tpu.matmul %19, %21, %cst_15 {dimension_numbers = #tpu.dot_dimension_numbers<[1], [0], [0], [1], [0, 0, 1, 1], [], []>} : vector<8x128xbf16>, vector<128x128xbf16>, vector<8x128xf32> -> vector<8x128xf32>
    %c2_16 = arith.constant 2 : index
    %c0_17 = arith.constant 0 : index
    %c0_18 = arith.constant 0 : index
    %23 = vector.load %arg3[%c2_16, %c0_17, %c0_18] : memref<5x1x128xf32, #tpu.memory_space<vmem>>, vector<1x1x128xf32>
    %24 = vector.shape_cast %23 : vector<1x1x128xf32> to vector<1x128xf32>
    %25 = vector.broadcast %24 : vector<1x128xf32> to vector<8x128xf32>
    %26 = arith.addf %22, %25 : vector<8x128xf32>
    %27 = math.tanh %26 : vector<8x128xf32>
    %28 = arith.truncf %27 : vector<8x128xf32> to vector<8x128xbf16>
    %c3 = arith.constant 3 : index
    %c0_19 = arith.constant 0 : index
    %c0_20 = arith.constant 0 : index
    %29 = vector.load %arg2[%c3, %c0_19, %c0_20] : memref<5x128x128xbf16, #tpu.memory_space<vmem>>, vector<1x128x128xbf16>
    %30 = vector.shape_cast %29 : vector<1x128x128xbf16> to vector<128x128xbf16>
    %cst_21 = arith.constant dense<0.000000e+00> : vector<8x128xf32>
    %31 = tpu.matmul %28, %30, %cst_21 {dimension_numbers = #tpu.dot_dimension_numbers<[1], [0], [0], [1], [0, 0, 1, 1], [], []>} : vector<8x128xbf16>, vector<128x128xbf16>, vector<8x128xf32> -> vector<8x128xf32>
    %c3_22 = arith.constant 3 : index
    %c0_23 = arith.constant 0 : index
    %c0_24 = arith.constant 0 : index
    %32 = vector.load %arg3[%c3_22, %c0_23, %c0_24] : memref<5x1x128xf32, #tpu.memory_space<vmem>>, vector<1x1x128xf32>
    %33 = vector.shape_cast %32 : vector<1x1x128xf32> to vector<1x128xf32>
    %34 = vector.broadcast %33 : vector<1x128xf32> to vector<8x128xf32>
    %35 = arith.addf %31, %34 : vector<8x128xf32>
    %36 = math.tanh %35 : vector<8x128xf32>
    %37 = arith.truncf %36 : vector<8x128xf32> to vector<8x128xbf16>
    %c4 = arith.constant 4 : index
    %c0_25 = arith.constant 0 : index
    %c0_26 = arith.constant 0 : index
    %38 = vector.load %arg2[%c4, %c0_25, %c0_26] : memref<5x128x128xbf16, #tpu.memory_space<vmem>>, vector<1x128x128xbf16>
    %39 = vector.shape_cast %38 : vector<1x128x128xbf16> to vector<128x128xbf16>
    %cst_27 = arith.constant dense<0.000000e+00> : vector<8x128xf32>
    %40 = tpu.matmul %37, %39, %cst_27 {dimension_numbers = #tpu.dot_dimension_numbers<[1], [0], [0], [1], [0, 0, 1, 1], [], []>} : vector<8x128xbf16>, vector<128x128xbf16>, vector<8x128xf32> -> vector<8x128xf32>
    %c4_28 = arith.constant 4 : index
    %c0_29 = arith.constant 0 : index
    %c0_30 = arith.constant 0 : index
    %41 = vector.load %arg3[%c4_28, %c0_29, %c0_30] : memref<5x1x128xf32, #tpu.memory_space<vmem>>, vector<1x1x128xf32>
    %42 = vector.shape_cast %41 : vector<1x1x128xf32> to vector<1x128xf32>
    %43 = vector.broadcast %42 : vector<1x128xf32> to vector<8x128xf32>
    %44 = arith.addf %40, %43 : vector<8x128xf32>
    %45 = math.tanh %44 : vector<8x128xf32>
    %c0_31 = arith.constant 0 : index
    %c0_32 = arith.constant 0 : index
    %46 = vector.load %arg4[%c0_31, %c0_32] : memref<8x128xf32, #tpu.memory_space<vmem>>, vector<8x128xf32>
    tpu.vector_store %arg4[%c0_31, %c0_32], %45 {strides = array<i32>} : memref<8x128xf32, #tpu.memory_space<vmem>>, vector<8x128xf32>,
    return
  }
  func.func @transform_0(%arg0: i32) -> (i32, i32) {
    %c0_i32 = arith.constant 0 : i32
    %c0_i32_0 = arith.constant 0 : i32
    return %arg0, %c0_i32 : i32, i32
  }
  func.func @transform_1(%arg0: i32) -> (i32, i32, i32) {
    %c0_i32 = arith.constant 0 : i32
    %c0_i32_0 = arith.constant 0 : i32
    %c0_i32_1 = arith.constant 0 : i32
    %c0_i32_2 = arith.constant 0 : i32
    return %c0_i32, %c0_i32_0, %c0_i32_1 : i32, i32, i32
  }
  func.func @transform_2(%arg0: i32) -> (i32, i32, i32) {
    %c0_i32 = arith.constant 0 : i32
    %c0_i32_0 = arith.constant 0 : i32
    %c0_i32_1 = arith.constant 0 : i32
    %c0_i32_2 = arith.constant 0 : i32
    return %c0_i32, %c0_i32_0, %c0_i32_1 : i32, i32, i32
  }
  func.func @transform_3(%arg0: i32) -> (i32, i32) {
    %c0_i32 = arith.constant 0 : i32
    %c0_i32_0 = arith.constant 0 : i32
    return %arg0, %c0_i32 : i32, i32
  }
}

</mosaic_0001>

<llo_original>
// kernel: mlp_forward.1
$region0: #{mlp_forward.1}
  #allocation0 [shape = 'u32[]', space=smem, size = 0x4, offset = 0x4, fixed_abs, tag = 'smem constant byte address 0x4 - core index']
  #allocation1 [shape = 'u32[144,128]{1,0:T(1,128)}', space=vmem, size = 0x12000, scoped, tag = 'internal scratch']
  %s0 = inlined_call_operand.vmem [shape: f32[8,128], index: 0, kind: input, shape index: {}]
  %s1 = inlined_call_operand.hbm [shape: bf16[5,128,128], index: 1, kind: input, shape index: {}]
  %s2 = inlined_call_operand.vmem [shape: f32[5,1,128], index: 2, kind: input, shape index: {}]
  %s3 = inlined_call_operand.hbm [shape: f32[8,128], index: 3, kind: output, shape index: {}]
  %s4 = sld [smem:[#allocation0]]
  $region26: #{mlp_forward.1} parent=0
    _
  %s6 = ssub.s32 1, %s4
  %s7 = scalar_select 0, %s6, %s4
  $region1: #{mlp_forward.1} parent=0
    #allocation2 [shape = 'u8[163840]{0}', space=vmem, size = 0x28000, scoped, tag = 'input window, operand 1, single buffered']
    #allocation3 [shape = 's32[1]{0}', space=sflag, size = 0x4, scoped, tag = 'scoped memory for mlp_forward.1']
    #allocation4 [shape = 's32[1]{0}', space=sflag, size = 0x4, scoped, tag = 'scoped memory for mlp_forward.1']
    #allocation5 [shape = 'u8[4096]{0}', space=vmem, size = 0x1000, scoped, tag = 'output window, operand 0, single buffered']
    %8 = vsyncpa [#allocation3], 0
    %9 = vsyncpa [#allocation4], 0
    // Predicated region
    $region2: #{mlp_forward.1} parent=1 // pred_check
      _
    $region3: #{mlp_forward.1} parent=1 // pred_check_branch
      %11 = sbr.rel (0) target = $region5
    $region4: #{mlp_forward.1} parent=1 // pred_region
      _
    $region5: #{mlp_forward.1} parent=1 // pred_fallthru
      _
    // Predicated region
    $region6: #{mlp_forward.1} parent=1 // pred_check
      _
    $region7: #{mlp_forward.1} parent=1 // pred_check_branch
      %13 = sbr.rel (0) target = $region9
    $region8: #{mlp_forward.1} parent=1 // pred_region
      %s15 = ssub.s32 5120, 5120
      %16 = vsyncadd [#allocation3], %s15
      %s17 = sshll.u32 [#allocation2], 4
      %s18 = int_to_ptr.vmem [resolvable:$true] %s17
      %23 = dma.hbm_to_vmem [thread:$0]  %s1, 5120, %s18, [#allocation3], 64, 64, 4
    $region9: #{mlp_forward.1} parent=1 // pred_fallthru
      _
    // Predicated region
    $region10: #{mlp_forward.1} parent=1 // pred_check
      _
    $region11: #{mlp_forward.1} parent=1 // pred_check_branch
      %25 = sbr.rel (0) target = $region13
    $region12: #{mlp_forward.1} parent=1 // pred_region
      _
    $region13: #{mlp_forward.1} parent=1 // pred_fallthru
      _
    // Predicated region
    $region14: #{mlp_forward.1} parent=1 // pred_check
      _
    $region15: #{mlp_forward.1} parent=1 // pred_check_branch
      %27 = sbr.rel (0) target = $region17
    $region16: #{mlp_forward.1} parent=1 // pred_region
      %28 = dma.done [#allocation3], 5120
    $region17: #{mlp_forward.1} parent=1 // pred_fallthru
      _
    %v30 = vld [vmem:[%s0] sm:$0xff]
    %v31 = vpack.c.bf16 %v30, %v30
    %v32 = vld [vmem:[#allocation2] sm:$0xf]
    %v33 = vld [vmem:[#allocation2 + $0x4] sm:$0xf]
    %v34 = vld [vmem:[#allocation2 + $0x8] sm:$0xf]
    %v35 = vld [vmem:[#allocation2 + $0xc] sm:$0xf]
    %v36 = vld [vmem:[#allocation2 + $0x10] sm:$0xf]
    %v37 = vld [vmem:[#allocation2 + $0x14] sm:$0xf]
    %v38 = vld [vmem:[#allocation2 + $0x18] sm:$0xf]
    %v39 = vld [vmem:[#allocation2 + $0x1c] sm:$0xf]
    %v40 = vld [vmem:[#allocation2 + $0x20] sm:$0xf]
    %v41 = vld [vmem:[#allocation2 + $0x24] sm:$0xf]
    %v42 = vld [vmem:[#allocation2 + $0x28] sm:$0xf]
    %v43 = vld [vmem:[#allocation2 + $0x2c] sm:$0xf]
    %v44 = vld [vmem:[#allocation2 + $0x30] sm:$0xf]
    %v45 = vld [vmem:[#allocation2 + $0x34] sm:$0xf]
    %v46 = vld [vmem:[#allocation2 + $0x38] sm:$0xf]
    %v47 = vld [vmem:[#allocation2 + $0x3c] sm:$0xf]
    %v48 = vld [vmem:[%s2] sm:$0x1]
    %v50 = vlaneseq
    %v51 = vshrl.u32 %v50, 7
    %v52 = vsub.s32 0, %v51
    %v53 = vrot.slane %v48, %v52
    %v71 = vunpack.c.l.b16 %v32
    %v72 = vunpack.c.l.b16 %v33
    %v73 = vunpack.c.l.b16 %v34
    %v74 = vunpack.c.l.b16 %v35
    %v75 = vunpack.c.l.b16 %v36
    %v76 = vunpack.c.l.b16 %v37
    %v77 = vunpack.c.l.b16 %v38
    %v78 = vunpack.c.l.b16 %v39
    %v79 = vunpack.c.l.b16 %v40
    %v80 = vunpack.c.l.b16 %v41
    %v81 = vunpack.c.l.b16 %v42
    %v82 = vunpack.c.l.b16 %v43
    %v83 = vunpack.c.l.b16 %v44
    %v84 = vunpack.c.l.b16 %v45
    %v85 = vunpack.c.l.b16 %v46
    %v86 = vunpack.c.l.b16 %v47
    %v87 = vpack.c.b16 %v72, %v71
    %v88 = vpack.c.b16 %v74, %v73
    %v89 = vpack.c.b16 %v76, %v75
    %v90 = vpack.c.b16 %v78, %v77
    %v91 = vpack.c.b16 %v80, %v79
    %v92 = vpack.c.b16 %v82, %v81
    %v93 = vpack.c.b16 %v84, %v83
    %v94 = vpack.c.b16 %v86, %v85
    %103 = vmatprep.subr.bf16.mxu0 0
    %104 = vmatpush1.bf16.msra.mxu0 %v94
    %105 = vmatprep.subr.bf16.mxu0 0
    %106 = vmatpush1.bf16.msra.mxu0 %v93
    %107 = vmatprep.subr.bf16.mxu0 0
    %108 = vmatpush1.bf16.msra.mxu0 %v92
    %109 = vmatprep.subr.bf16.mxu0 0
    %110 = vmatpush1.bf16.msra.mxu0 %v91
    %111 = vmatprep.subr.bf16.mxu0 0
    %112 = vmatpush1.bf16.msra.mxu0 %v90
    %113 = vmatprep.subr.bf16.mxu0 0
    %114 = vmatpush1.bf16.msra.mxu0 %v89
    %115 = vmatprep.subr.bf16.mxu0 0
    %116 = vmatpush1.bf16.msra.mxu0 %v88
    %117 = vmatprep.subr.bf16.mxu0 0
    %118 = vmatpush1.bf16.msra.mxu0 %v87
    %119 = vmatprep.subr.bf16.mxu0 0
    %120 = vmatpush2.bf16.msra.mxu0 0
    %121 = vmatprep.subr.bf16.mxu0 0
    %122 = vmatpush2.bf16.msra.mxu0 0
    %123 = vmatprep.subr.bf16.mxu0 0
    %124 = vmatpush2.bf16.msra.mxu0 0
    %125 = vmatprep.subr.bf16.mxu0 0
    %126 = vmatpush2.bf16.msra.mxu0 0
    %127 = vmatprep.subr.bf16.mxu0 0
    %128 = vmatpush2.bf16.msra.mxu0 0
    %129 = vmatprep.subr.bf16.mxu0 0
    %130 = vmatpush2.bf16.msra.mxu0 0
    %131 = vmatprep.subr.bf16.mxu0 0
    %132 = vmatpush2.bf16.msra.mxu0 0
    %133 = vmatprep.subr.bf16.mxu0 0
    %134 = vmatpush2.bf16.msra.mxu0 0
    %135 = vmatprep.mubr.bf16.mxu0 0
    %136 = vmatmul.mubr.bf16.gmra.mxu0 %v31
    %v137 = vpop.f32.mrf.mxu0
    %v138 = vadd.f32 %v53, %v137
    %v139 = vpop.f32.mrf.mxu0
    %v140 = vpop.f32.mrf.mxu0
    %v141 = vpop.f32.mrf.mxu0
    %142 = vdwg.mxu0
    %v143 = vtanh.pop %v138
    %v144 = vpack.c.bf16 %v143, %v143
    %s145 = scalar_lea.vmem [#allocation2], 64
    %v146 = vld [vmem:[%s145] sm:$0xf]
    %v147 = vld [vmem:[%s145 + $0x4] sm:$0xf]
    %v148 = vld [vmem:[%s145 + $0x8] sm:$0xf]
    %v149 = vld [vmem:[%s145 + $0xc] sm:$0xf]
    %v150 = vld [vmem:[%s145 + $0x10] sm:$0xf]
    %v151 = vld [vmem:[%s145 + $0x14] sm:$0xf]
    %v152 = vld [vmem:[%s145 + $0x18] sm:$0xf]
    %v153 = vld [vmem:[%s145 + $0x1c] sm:$0xf]
    %v154 = vld [vmem:[%s145 + $0x20] sm:$0xf]
    %v155 = vld [vmem:[%s145 + $0x24] sm:$0xf]
    %v156 = vld [vmem:[%s145 + $0x28] sm:$0xf]
    %v157 = vld [vmem:[%s145 + $0x2c] sm:$0xf]
    %v158 = vld [vmem:[%s145 + $0x30] sm:$0xf]
    %v159 = vld [vmem:[%s145 + $0x34] sm:$0xf]
    %v160 = vld [vmem:[%s145 + $0x38] sm:$0xf]
    %v161 = vld [vmem:[%s145 + $0x3c] sm:$0xf]
    %s162 = scalar_lea.vmem %s2, 1
    %v163 = vld [vmem:[%s162] sm:$0x1]
    %v165 = vlaneseq
    %v166 = vshrl.u32 %v165, 7
    %v167 = vsub.s32 0, %v166
    %v168 = vrot.slane %v163, %v167
    %v186 = vunpack.c.l.b16 %v146
    %v187 = vunpack.c.l.b16 %v147
    %v188 = vunpack.c.l.b16 %v148
    %v189 = vunpack.c.l.b16 %v149
    %v190 = vunpack.c.l.b16 %v150
    %v191 = vunpack.c.l.b16 %v151
    %v192 = vunpack.c.l.b16 %v152
    %v193 = vunpack.c.l.b16 %v153
    %v194 = vunpack.c.l.b16 %v154
    %v195 = vunpack.c.l.b16 %v155
    %v196 = vunpack.c.l.b16 %v156
    %v197 = vunpack.c.l.b16 %v157
    %v198 = vunpack.c.l.b16 %v158
    %v199 = vunpack.c.l.b16 %v159
    %v200 = vunpack.c.l.b16 %v160
    %v201 = vunpack.c.l.b16 %v161
    %v202 = vpack.c.b16 %v187, %v186
    %v203 = vpack.c.b16 %v189, %v188
    %v204 = vpack.c.b16 %v191, %v190
    %v205 = vpack.c.b16 %v193, %v192
    %v206 = vpack.c.b16 %v195, %v194
    %v207 = vpack.c.b16 %v197, %v196
    %v208 = vpack.c.b16 %v199, %v198
    %v209 = vpack.c.b16 %v201, %v200
    %218 = vmatprep.subr.bf16.mxu0 0
    %219 = vmatpush1.bf16.msra.mxu0 %v209
    %220 = vmatprep.subr.bf16.mxu0 0
    %221 = vmatpush1.bf16.msra.mxu0 %v208
    %222 = vmatprep.subr.bf16.mxu0 0
    %223 = vmatpush1.bf16.msra.mxu0 %v207
    %224 = vmatprep.subr.bf16.mxu0 0
    %225 = vmatpush1.bf16.msra.mxu0 %v206
    %226 = vmatprep.subr.bf16.mxu0 0
    %227 = vmatpush1.bf16.msra.mxu0 %v205
    %228 = vmatprep.subr.bf16.mxu0 0
    %229 = vmatpush1.bf16.msra.mxu0 %v204
    %230 = vmatprep.subr.bf16.mxu0 0
    %231 = vmatpush1.bf16.msra.mxu0 %v203
    %232 = vmatprep.subr.bf16.mxu0 0
    %233 = vmatpush1.bf16.msra.mxu0 %v202
    %234 = vmatprep.subr.bf16.mxu0 0
    %235 = vmatpush2.bf16.msra.mxu0 0
    %236 = vmatprep.subr.bf16.mxu0 0
    %237 = vmatpush2.bf16.msra.mxu0 0
    %238 = vmatprep.subr.bf16.mxu0 0
    %239 = vmatpush2.bf16.msra.mxu0 0
    %240 = vmatprep.subr.bf16.mxu0 0
    %241 = vmatpush2.bf16.msra.mxu0 0
    %242 = vmatprep.subr.bf16.mxu0 0
    %243 = vmatpush2.bf16.msra.mxu0 0
    %244 = vmatprep.subr.bf16.mxu0 0
    %245 = vmatpush2.bf16.msra.mxu0 0
    %246 = vmatprep.subr.bf16.mxu0 0
    %247 = vmatpush2.bf16.msra.mxu0 0
    %248 = vmatprep.subr.bf16.mxu0 0
    %249 = vmatpush2.bf16.msra.mxu0 0
    %250 = vmatprep.mubr.bf16.mxu0 0
    %251 = vmatmul.mubr.bf16.gmra.mxu0 %v144
    %v252 = vpop.f32.mrf.mxu0
    %v253 = vadd.f32 %v168, %v252
    %v254 = vpop.f32.mrf.mxu0
    %v255 = vpop.f32.mrf.mxu0
    %v256 = vpop.f32.mrf.mxu0
    %257 = vdwg.mxu0
    %v258 = vtanh.pop %v253
    %v259 = vpack.c.bf16 %v258, %v258
    %s260 = scalar_lea.vmem [#allocation2], 128
    %v261 = vld [vmem:[%s260] sm:$0xf]
    %v262 = vld [vmem:[%s260 + $0x4] sm:$0xf]
    %v263 = vld [vmem:[%s260 + $0x8] sm:$0xf]
    %v264 = vld [vmem:[%s260 + $0xc] sm:$0xf]
    %v265 = vld [vmem:[%s260 + $0x10] sm:$0xf]
    %v266 = vld [vmem:[%s260 + $0x14] sm:$0xf]
    %v267 = vld [vmem:[%s260 + $0x18] sm:$0xf]
    %v268 = vld [vmem:[%s260 + $0x1c] sm:$0xf]
    %v269 = vld [vmem:[%s260 + $0x20] sm:$0xf]
    %v270 = vld [vmem:[%s260 + $0x24] sm:$0xf]
    %v271 = vld [vmem:[%s260 + $0x28] sm:$0xf]
    %v272 = vld [vmem:[%s260 + $0x2c] sm:$0xf]
    %v273 = vld [vmem:[%s260 + $0x30] sm:$0xf]
    %v274 = vld [vmem:[%s260 + $0x34] sm:$0xf]
    %v275 = vld [vmem:[%s260 + $0x38] sm:$0xf]
    %v276 = vld [vmem:[%s260 + $0x3c] sm:$0xf]
    %s277 = scalar_lea.vmem %s2, 2
    %v278 = vld [vmem:[%s277] sm:$0x1]
    %v280 = vlaneseq
    %v281 = vshrl.u32 %v280, 7
    %v282 = vsub.s32 0, %v281
    %v283 = vrot.slane %v278, %v282
    %v301 = vunpack.c.l.b16 %v261
    %v302 = vunpack.c.l.b16 %v262
    %v303 = vunpack.c.l.b16 %v263
    %v304 = vunpack.c.l.b16 %v264
    %v305 = vunpack.c.l.b16 %v265
    %v306 = vunpack.c.l.b16 %v266
    %v307 = vunpack.c.l.b16 %v267
    %v308 = vunpack.c.l.b16 %v268
    %v309 = vunpack.c.l.b16 %v269
    %v310 = vunpack.c.l.b16 %v270
    %v311 = vunpack.c.l.b16 %v271
    %v312 = vunpack.c.l.b16 %v272
    %v313 = vunpack.c.l.b16 %v273
    %v314 = vunpack.c.l.b16 %v274
    %v315 = vunpack.c.l.b16 %v275
    %v316 = vunpack.c.l.b16 %v276
    %v317 = vpack.c.b16 %v302, %v301
    %v318 = vpack.c.b16 %v304, %v303
    %v319 = vpack.c.b16 %v306, %v305
    %v320 = vpack.c.b16 %v308, %v307
    %v321 = vpack.c.b16 %v310, %v309
    %v322 = vpack.c.b16 %v312, %v311
    %v323 = vpack.c.b16 %v314, %v313
    %v324 = vpack.c.b16 %v316, %v315
    %333 = vmatprep.subr.bf16.mxu0 0
    %334 = vmatpush1.bf16.msra.mxu0 %v324
    %335 = vmatprep.subr.bf16.mxu0 0
    %336 = vmatpush1.bf16.msra.mxu0 %v323
    %337 = vmatprep.subr.bf16.mxu0 0
    %338 = vmatpush1.bf16.msra.mxu0 %v322
    %339 = vmatprep.subr.bf16.mxu0 0
    %340 = vmatpush1.bf16.msra.mxu0 %v321
    %341 = vmatprep.subr.bf16.mxu0 0
    %342 = vmatpush1.bf16.msra.mxu0 %v320
    %343 = vmatprep.subr.bf16.mxu0 0
    %344 = vmatpush1.bf16.msra.mxu0 %v319
    %345 = vmatprep.subr.bf16.mxu0 0
    %346 = vmatpush1.bf16.msra.mxu0 %v318
    %347 = vmatprep.subr.bf16.mxu0 0
    %348 = vmatpush1.bf16.msra.mxu0 %v317
    %349 = vmatprep.subr.bf16.mxu0 0
    %350 = vmatpush2.bf16.msra.mxu0 0
    %351 = vmatprep.subr.bf16.mxu0 0
    %352 = vmatpush2.bf16.msra.mxu0 0
    %353 = vmatprep.subr.bf16.mxu0 0
    %354 = vmatpush2.bf16.msra.mxu0 0
    %355 = vmatprep.subr.bf16.mxu0 0
    %356 = vmatpush2.bf16.msra.mxu0 0
    %357 = vmatprep.subr.bf16.mxu0 0
    %358 = vmatpush2.bf16.msra.mxu0 0
    %359 = vmatprep.subr.bf16.mxu0 0
    %360 = vmatpush2.bf16.msra.mxu0 0
    %361 = vmatprep.subr.bf16.mxu0 0
    %362 = vmatpush2.bf16.msra.mxu0 0
    %363 = vmatprep.subr.bf16.mxu0 0
    %364 = vmatpush2.bf16.msra.mxu0 0
    %365 = vmatprep.mubr.bf16.mxu0 0
    %366 = vmatmul.mubr.bf16.gmra.mxu0 %v259
    %v367 = vpop.f32.mrf.mxu0
    %v368 = vadd.f32 %v283, %v367
    %v369 = vpop.f32.mrf.mxu0
    %v370 = vpop.f32.mrf.mxu0
    %v371 = vpop.f32.mrf.mxu0
    %372 = vdwg.mxu0
    %v373 = vtanh.pop %v368
    %v374 = vpack.c.bf16 %v373, %v373
    %s375 = scalar_lea.vmem [#allocation2], 192
    %v376 = vld [vmem:[%s375] sm:$0xf]
    %v377 = vld [vmem:[%s375 + $0x4] sm:$0xf]
    %v378 = vld [vmem:[%s375 + $0x8] sm:$0xf]
    %v379 = vld [vmem:[%s375 + $0xc] sm:$0xf]
    %v380 = vld [vmem:[%s375 + $0x10] sm:$0xf]
    %v381 = vld [vmem:[%s375 + $0x14] sm:$0xf]
    %v382 = vld [vmem:[%s375 + $0x18] sm:$0xf]
    %v383 = vld [vmem:[%s375 + $0x1c] sm:$0xf]
    %v384 = vld [vmem:[%s375 + $0x20] sm:$0xf]
    %v385 = vld [vmem:[%s375 + $0x24] sm:$0xf]
    %v386 = vld [vmem:[%s375 + $0x28] sm:$0xf]
    %v387 = vld [vmem:[%s375 + $0x2c] sm:$0xf]
    %v388 = vld [vmem:[%s375 + $0x30] sm:$0xf]
    %v389 = vld [vmem:[%s375 + $0x34] sm:$0xf]
    %v390 = vld [vmem:[%s375 + $0x38] sm:$0xf]
    %v391 = vld [vmem:[%s375 + $0x3c] sm:$0xf]
    %s392 = scalar_lea.vmem %s2, 3
    %v393 = vld [vmem:[%s392] sm:$0x1]
    %v395 = vlaneseq
    %v396 = vshrl.u32 %v395, 7
    %v397 = vsub.s32 0, %v396
    %v398 = vrot.slane %v393, %v397
    %v416 = vunpack.c.l.b16 %v376
    %v417 = vunpack.c.l.b16 %v377
    %v418 = vunpack.c.l.b16 %v378
    %v419 = vunpack.c.l.b16 %v379
    %v420 = vunpack.c.l.b16 %v380
    %v421 = vunpack.c.l.b16 %v381
    %v422 = vunpack.c.l.b16 %v382
    %v423 = vunpack.c.l.b16 %v383
    %v424 = vunpack.c.l.b16 %v384
    %v425 = vunpack.c.l.b16 %v385
    %v426 = vunpack.c.l.b16 %v386
    %v427 = vunpack.c.l.b16 %v387
    %v428 = vunpack.c.l.b16 %v388
    %v429 = vunpack.c.l.b16 %v389
    %v430 = vunpack.c.l.b16 %v390
    %v431 = vunpack.c.l.b16 %v391
    %v432 = vpack.c.b16 %v417, %v416
    %v433 = vpack.c.b16 %v419, %v418
    %v434 = vpack.c.b16 %v421, %v420
    %v435 = vpack.c.b16 %v423, %v422
    %v436 = vpack.c.b16 %v425, %v424
    %v437 = vpack.c.b16 %v427, %v426
    %v438 = vpack.c.b16 %v429, %v428
    %v439 = vpack.c.b16 %v431, %v430
    %448 = vmatprep.subr.bf16.mxu0 0
    %449 = vmatpush1.bf16.msra.mxu0 %v439
    %450 = vmatprep.subr.bf16.mxu0 0
    %451 = vmatpush1.bf16.msra.mxu0 %v438
    %452 = vmatprep.subr.bf16.mxu0 0
    %453 = vmatpush1.bf16.msra.mxu0 %v437
    %454 = vmatprep.subr.bf16.mxu0 0
    %455 = vmatpush1.bf16.msra.mxu0 %v436
    %456 = vmatprep.subr.bf16.mxu0 0
    %457 = vmatpush1.bf16.msra.mxu0 %v435
    %458 = vmatprep.subr.bf16.mxu0 0
    %459 = vmatpush1.bf16.msra.mxu0 %v434
    %460 = vmatprep.subr.bf16.mxu0 0
    %461 = vmatpush1.bf16.msra.mxu0 %v433
    %462 = vmatprep.subr.bf16.mxu0 0
    %463 = vmatpush1.bf16.msra.mxu0 %v432
    %464 = vmatprep.subr.bf16.mxu0 0
    %465 = vmatpush2.bf16.msra.mxu0 0
    %466 = vmatprep.subr.bf16.mxu0 0
    %467 = vmatpush2.bf16.msra.mxu0 0
    %468 = vmatprep.subr.bf16.mxu0 0
    %469 = vmatpush2.bf16.msra.mxu0 0
    %470 = vmatprep.subr.bf16.mxu0 0
    %471 = vmatpush2.bf16.msra.mxu0 0
    %472 = vmatprep.subr.bf16.mxu0 0
    %473 = vmatpush2.bf16.msra.mxu0 0
    %474 = vmatprep.subr.bf16.mxu0 0
    %475 = vmatpush2.bf16.msra.mxu0 0
    %476 = vmatprep.subr.bf16.mxu0 0
    %477 = vmatpush2.bf16.msra.mxu0 0
    %478 = vmatprep.subr.bf16.mxu0 0
    %479 = vmatpush2.bf16.msra.mxu0 0
    %480 = vmatprep.mubr.bf16.mxu0 0
    %481 = vmatmul.mubr.bf16.gmra.mxu0 %v374
    %v482 = vpop.f32.mrf.mxu0
    %v483 = vadd.f32 %v398, %v482
    %v484 = vpop.f32.mrf.mxu0
    %v485 = vpop.f32.mrf.mxu0
    %v486 = vpop.f32.mrf.mxu0
    %487 = vdwg.mxu0
    %v488 = vtanh.pop %v483
    %v489 = vpack.c.bf16 %v488, %v488
    %s490 = scalar_lea.vmem [#allocation2], 256
    %v491 = vld [vmem:[%s490] sm:$0xf]
    %v492 = vld [vmem:[%s490 + $0x4] sm:$0xf]
    %v493 = vld [vmem:[%s490 + $0x8] sm:$0xf]
    %v494 = vld [vmem:[%s490 + $0xc] sm:$0xf]
    %v495 = vld [vmem:[%s490 + $0x10] sm:$0xf]
    %v496 = vld [vmem:[%s490 + $0x14] sm:$0xf]
    %v497 = vld [vmem:[%s490 + $0x18] sm:$0xf]
    %v498 = vld [vmem:[%s490 + $0x1c] sm:$0xf]
    %v499 = vld [vmem:[%s490 + $0x20] sm:$0xf]
    %v500 = vld [vmem:[%s490 + $0x24] sm:$0xf]
    %v501 = vld [vmem:[%s490 + $0x28] sm:$0xf]
    %v502 = vld [vmem:[%s490 + $0x2c] sm:$0xf]
    %v503 = vld [vmem:[%s490 + $0x30] sm:$0xf]
    %v504 = vld [vmem:[%s490 + $0x34] sm:$0xf]
    %v505 = vld [vmem:[%s490 + $0x38] sm:$0xf]
    %v506 = vld [vmem:[%s490 + $0x3c] sm:$0xf]
    %s507 = scalar_lea.vmem %s2, 4
    %v508 = vld [vmem:[%s507] sm:$0x1]
    %v510 = vlaneseq
    %v511 = vshrl.u32 %v510, 7
    %v512 = vsub.s32 0, %v511
    %v513 = vrot.slane %v508, %v512
    %v531 = vunpack.c.l.b16 %v491
    %v532 = vunpack.c.l.b16 %v492
    %v533 = vunpack.c.l.b16 %v493
    %v534 = vunpack.c.l.b16 %v494
    %v535 = vunpack.c.l.b16 %v495
    %v536 = vunpack.c.l.b16 %v496
    %v537 = vunpack.c.l.b16 %v497
    %v538 = vunpack.c.l.b16 %v498
    %v539 = vunpack.c.l.b16 %v499
    %v540 = vunpack.c.l.b16 %v500
    %v541 = vunpack.c.l.b16 %v501
    %v542 = vunpack.c.l.b16 %v502
    %v543 = vunpack.c.l.b16 %v503
    %v544 = vunpack.c.l.b16 %v504
    %v545 = vunpack.c.l.b16 %v505
    %v546 = vunpack.c.l.b16 %v506
    %v547 = vpack.c.b16 %v532, %v531
    %v548 = vpack.c.b16 %v534, %v533
    %v549 = vpack.c.b16 %v536, %v535
    %v550 = vpack.c.b16 %v538, %v537
    %v551 = vpack.c.b16 %v540, %v539
    %v552 = vpack.c.b16 %v542, %v541
    %v553 = vpack.c.b16 %v544, %v543
    %v554 = vpack.c.b16 %v546, %v545
    %563 = vmatprep.subr.bf16.mxu0 0
    %564 = vmatpush1.bf16.msra.mxu0 %v554
    %565 = vmatprep.subr.bf16.mxu0 0
    %566 = vmatpush1.bf16.msra.mxu0 %v553
    %567 = vmatprep.subr.bf16.mxu0 0
    %568 = vmatpush1.bf16.msra.mxu0 %v552
    %569 = vmatprep.subr.bf16.mxu0 0
    %570 = vmatpush1.bf16.msra.mxu0 %v551
    %571 = vmatprep.subr.bf16.mxu0 0
    %572 = vmatpush1.bf16.msra.mxu0 %v550
    %573 = vmatprep.subr.bf16.mxu0 0
    %574 = vmatpush1.bf16.msra.mxu0 %v549
    %575 = vmatprep.subr.bf16.mxu0 0
    %576 = vmatpush1.bf16.msra.mxu0 %v548
    %577 = vmatprep.subr.bf16.mxu0 0
    %578 = vmatpush1.bf16.msra.mxu0 %v547
    %579 = vmatprep.subr.bf16.mxu0 0
    %580 = vmatpush2.bf16.msra.mxu0 0
    %581 = vmatprep.subr.bf16.mxu0 0
    %582 = vmatpush2.bf16.msra.mxu0 0
    %583 = vmatprep.subr.bf16.mxu0 0
    %584 = vmatpush2.bf16.msra.mxu0 0
    %585 = vmatprep.subr.bf16.mxu0 0
    %586 = vmatpush2.bf16.msra.mxu0 0
    %587 = vmatprep.subr.bf16.mxu0 0
    %588 = vmatpush2.bf16.msra.mxu0 0
    %589 = vmatprep.subr.bf16.mxu0 0
    %590 = vmatpush2.bf16.msra.mxu0 0
    %591 = vmatprep.subr.bf16.mxu0 0
    %592 = vmatpush2.bf16.msra.mxu0 0
    %593 = vmatprep.subr.bf16.mxu0 0
    %594 = vmatpush2.bf16.msra.mxu0 0
    %595 = vmatprep.mubr.bf16.mxu0 0
    %596 = vmatmul.mubr.bf16.gmra.mxu0 %v489
    %v597 = vpop.f32.mrf.mxu0
    %v598 = vadd.f32 %v513, %v597
    %v599 = vpop.f32.mrf.mxu0
    %v600 = vpop.f32.mrf.mxu0
    %v601 = vpop.f32.mrf.mxu0
    %602 = vdwg.mxu0
    %v603 = vtanh.pop %v598
    %604 = vst [vmem:[#allocation5] sm:$0xff] %v603
    // Predicated region
    $region18: #{mlp_forward.1} parent=1 // pred_check
      _
    $region19: #{mlp_forward.1} parent=1 // pred_check_branch
      %606 = sbr.rel (0) target = $region21
    $region20: #{mlp_forward.1} parent=1 // pred_region
      %s608 = ssub.s32 128, 128
      %609 = vsyncadd [#allocation4], %s608
      %s611 = sshll.u32 [#allocation5], 4
      %s612 = int_to_ptr.vmem [resolvable:$true] %s611
      %614 = dma.vmem_to_hbm [thread:$0]  %s612, 128, %s3, [#allocation4]
    $region21: #{mlp_forward.1} parent=1 // pred_fallthru
      _
    // Predicated region
    $region22: #{mlp_forward.1} parent=1 // pred_check
      _
    $region23: #{mlp_forward.1} parent=1 // pred_check_branch
      %616 = sbr.rel (0) target = $region25
    $region24: #{mlp_forward.1} parent=1 // pred_region
      %617 = dma.done [#allocation4], 128
    $region25: #{mlp_forward.1} parent=1 // pred_fallthru
      _
    %618 = vsyncpa [#allocation3], 1
    %619 = vsyncpa [#allocation4], 1

</llo_original>
